<compile_context>
chip_gen: v7x
topology: tpu7x:2x2x1
jax: 0.10.0
libtpu: 0.0.40
codegen_flags: <defaults>
</compile_context>

<pallas_src>
import jax
import jax.numpy as jnp
from jax.experimental import pallas as pl
from jax.experimental.pallas import tpu as pltpu

BN_EPS = 1e-5
BLOCK_BUDGET_BYTES = 24 * 1024 * 1024   # target for double-buffered block tiles


def _round_up(a, b):
    return (a + b - 1) // b * b


def _compiler_params(dimension_semantics, block_bytes):
    # Raise the scoped-VMEM limit only when the per-step block working set
    # needs it; otherwise leave the platform defaults untouched.
    vmem_limit = None
    if block_bytes > 12 * 1024 * 1024:
        vmem_limit = int(min(block_bytes + (4 << 20), 56 * 1024 * 1024))
    return pltpu.CompilerParams(dimension_semantics=dimension_semantics,
                                vmem_limit_bytes=vmem_limit)


# ---------------------------------------------------------------------------
# Kernel bodies
# ---------------------------------------------------------------------------
def _conv_relu(cols_ref, w_ref):
    # Conv as im2col matmul on the MXU (f32 accumulation), then ReLU.
    y = jnp.dot(cols_ref[...], w_ref[...], preferred_element_type=jnp.float32)
    return jnp.maximum(y, 0.0)


def _accumulate_stats(y, sum_ref, ssq_ref):
    # Sublane-parallel partial sums: reshape (TM, Fp) -> (TM//8, 8, Fp) along
    # the vreg tiling and reduce the leading axis (pure VPU adds).  The final
    # cross-sublane collapse happens once in the wrapper, not per tile.
    @pl.when(pl.program_id(1) == 0)
    def _():
        sum_ref[...] = jnp.zeros_like(sum_ref)
        ssq_ref[...] = jnp.zeros_like(ssq_ref)

    tm, f = y.shape
    y3 = y.reshape(tm // 8, 8, f)
    sum_ref[...] += jnp.sum(y3, axis=0, keepdims=True)
    ssq_ref[...] += jnp.sum(y3 * y3, axis=0, keepdims=True)


def conv_relu_stats_kernel(cols_ref, w_ref, sum_ref, ssq_ref):
    # Pass 1 (fused-recompute mode): statistics only, no intermediate store.
    y = _conv_relu(cols_ref, w_ref)
    _accumulate_stats(y, sum_ref, ssq_ref)


def conv_relu_store_stats_kernel(cols_ref, w_ref, y_ref, sum_ref, ssq_ref):
    # Pass 1 (stored-intermediate mode): also write ReLU'd conv in y dtype.
    y = _conv_relu(cols_ref, w_ref)
    y_ref[...] = y.astype(y_ref.dtype)
    _accumulate_stats(y, sum_ref, ssq_ref)


def bn_recompute_kernel(cols_ref, w_ref, scale_ref, shift_ref, out_ref):
    # Pass 2 (fused-recompute mode): matmul + ReLU + single BN FMA per element.
    y = _conv_relu(cols_ref, w_ref)
    out_ref[...] = (y * scale_ref[...] + shift_ref[...]).astype(out_ref.dtype)


def bn_apply_kernel(y_ref, scale_ref, shift_ref, out_ref):
    # Pass 2 (stored-intermediate mode): single BN FMA per element.
    y = y_ref[...].astype(jnp.float32)
    out_ref[...] = (y * scale_ref[...] + shift_ref[...]).astype(out_ref.dtype)


# ---------------------------------------------------------------------------
# Wrapper
# ---------------------------------------------------------------------------
def encode_block(x, weight, gamma, beta, k=4, s=2, p=1,
                 matmul_dtype=jnp.bfloat16, fuse_recompute=None,
                 out_layout="NCHW", max_tm=None):
    """x: (N, fi, H, W).  weight: (fo, fi, k, k).  Returns NCHW (or NHWC)."""
    N, C, H, W = x.shape
    fo = weight.shape[0]
    Ho = (H + 2 * p - k) // s + 1
    Wo = (W + 2 * p - k) // s + 1
    M = N * Ho * Wo
    K = C * k * k

    out_dtype = x.dtype
    in_dtype = matmul_dtype if matmul_dtype is not None else jnp.float32
    y_dtype = in_dtype                       # stored intermediate dtype
    in_it = jnp.dtype(in_dtype).itemsize
    y_it = jnp.dtype(y_dtype).itemsize
    out_it = jnp.dtype(out_dtype).itemsize

    Kp = _round_up(K, 128)                   # lane-dense MXU / stores
    Fp = _round_up(fo, 128)

    if fuse_recompute is None:
        # Re-reading the im2col tiles in pass 2 beats writing + re-reading an
        # (M, Fp) intermediate when Kp bytes/row <= 2 * Fp bytes/row.
        fuse_recompute = Kp * in_it <= 2 * Fp * y_it

    # ---- tile size from an explicit VMEM block budget ----------------------
    row_p1 = 2 * Kp * in_it + (0 if fuse_recompute else 2 * Fp * y_it)
    row_p2 = (2 * Kp * in_it if fuse_recompute else 2 * Fp * y_it) + 2 * Fp * out_it
    fixed = 2 * Kp * Fp * in_it + 4 * 8 * Fp * 4   # resident weight + stats
    budget = max(BLOCK_BUDGET_BYTES - fixed, 1 << 20)
    TM = budget // max(row_p1, row_p2)
    TM = min(TM, 4096, _round_up(M, 16))
    TM = max(16, (TM // 16) * 16)            # bf16 packs 2 rows per sublane
    if max_tm is not None:
        TM = max(16, (min(TM, max_tm) // 16) * 16)

    grid_m = pl.cdiv(M, TM)
    P = 2 if grid_m >= 2 else 1              # leading "parallel" axis (v7x 2 TCs)
    grid_m = _round_up(grid_m, P)
    inner = grid_m // P
    M_pad = grid_m * TM

    # ---- glue: im2col in matmul dtype (PyTorch (C, kh, kw) flatten order) ---
    xc = x.astype(in_dtype)
    xp = jnp.pad(xc, ((0, 0), (0, 0), (p, p), (p, p)))
    patches = []
    for i in range(k):
        for j in range(k):
            patches.append(xp[:, :, i:i + s * (Ho - 1) + 1:s, j:j + s * (Wo - 1) + 1:s])
    pat = jnp.stack(patches, axis=2)          # (N, C, k*k, Ho, Wo)
    pat = pat.transpose(0, 3, 4, 1, 2)        # (N, Ho, Wo, C, k*k)
    cols = pat.reshape(M, K)
    wf = weight.reshape(fo, K).T.astype(in_dtype)

    cols_p = jnp.pad(cols, ((0, M_pad - M), (0, Kp - K)))
    wf_p = jnp.pad(wf, ((0, Kp - K), (0, Fp - fo)))
    gamma_p = jnp.pad(gamma.astype(jnp.float32).reshape(1, fo), ((0, 0), (0, Fp - fo)))
    beta_p = jnp.pad(beta.astype(jnp.float32).reshape(1, fo), ((0, 0), (0, Fp - fo)))

    # ---- VMEM working-set estimate (for the scoped-limit decision) ---------
    stat_bytes = 2 * 2 * 8 * Fp * 4
    vec_bytes = 2 * 2 * Fp * 4
    w_bytes = 2 * Kp * Fp * in_it
    p1_bytes = 2 * TM * Kp * in_it + w_bytes + stat_bytes \
        + (0 if fuse_recompute else 2 * TM * Fp * y_it)
    p2_bytes = (2 * TM * Kp * in_it + w_bytes if fuse_recompute
                else 2 * TM * Fp * y_it) + vec_bytes + 2 * TM * Fp * out_it
    block_bytes = max(p1_bytes, p2_bytes)

    # ---- pass 1: conv + relu + global per-channel stats --------------------
    m_index = lambda c, i, inner=inner: (c * inner + i, 0)
    pass1_in_specs = [
        pl.BlockSpec((TM, Kp), m_index),
        pl.BlockSpec((Kp, Fp), lambda c, i: (0, 0)),   # weight resident across M
    ]
    stat_shape = jax.ShapeDtypeStruct((P, 8, Fp), jnp.float32)
    stat_spec = pl.BlockSpec((1, 8, Fp), lambda c, i: (c, 0, 0))
    pass1_params = _compiler_params(("parallel", "arbitrary"), block_bytes)
    matmul_flops = 2 * M_pad * Kp * Fp

    y_relu = None
    if fuse_recompute:
        s1, s2 = pl.pallas_call(
            conv_relu_stats_kernel,
            out_shape=(stat_shape, stat_shape),
            grid=(P, inner),
            in_specs=pass1_in_specs,
            out_specs=(stat_spec, stat_spec),
            compiler_params=pass1_params,
            cost_estimate=pl.CostEstimate(
                flops=int(matmul_flops), transcendentals=0,
                bytes_accessed=int(M_pad * Kp * in_it + Kp * Fp * in_it)),
        )(cols_p, wf_p)
    else:
        y_relu, s1, s2 = pl.pallas_call(
            conv_relu_store_stats_kernel,
            out_shape=(jax.ShapeDtypeStruct((M_pad, Fp), y_dtype),
                       stat_shape, stat_shape),
            grid=(P, inner),
            in_specs=pass1_in_specs,
            out_specs=(pl.BlockSpec((TM, Fp), m_index), stat_spec, stat_spec),
            compiler_params=pass1_params,
            cost_estimate=pl.CostEstimate(
                flops=int(matmul_flops), transcendentals=0,
                bytes_accessed=int(M_pad * Kp * in_it + Kp * Fp * in_it
                                   + M_pad * Fp * y_it)),
        )(cols_p, wf_p)

    # ---- per-channel scale/shift, computed once -----------------------------
    # NOTE: var = E[y^2] - E[y]^2 in f32; for extremely large M a shifted /
    # Welford-style combine would be more robust to cancellation.
    inv_m = jnp.float32(1.0 / M)                        # true M, not padded
    total = jnp.sum(s1, axis=(0, 1)).reshape(1, Fp)
    total_sq = jnp.sum(s2, axis=(0, 1)).reshape(1, Fp)
    mean = total * inv_m
    var = jnp.maximum(total_sq * inv_m - mean * mean, 0.0)
    inv_std = jax.lax.rsqrt(var + BN_EPS)
    scale = gamma_p * inv_std                           # (1, Fp)
    shift = beta_p - mean * scale                       # (1, Fp)

    # ---- pass 2: normalize (lane-dense store) -------------------------------
    pass2_params = _compiler_params(("parallel",), block_bytes)
    if fuse_recompute:
        out_flat = pl.pallas_call(
            bn_recompute_kernel,
            out_shape=jax.ShapeDtypeStruct((M_pad, Fp), out_dtype),
            grid=(grid_m,),
            in_specs=[
                pl.BlockSpec((TM, Kp), lambda i: (i, 0)),
                pl.BlockSpec((Kp, Fp), lambda i: (0, 0)),
                pl.BlockSpec((1, Fp), lambda i: (0, 0)),
                pl.BlockSpec((1, Fp), lambda i: (0, 0)),
            ],
            out_specs=pl.BlockSpec((TM, Fp), lambda i: (i, 0)),
            compiler_params=pass2_params,
            cost_estimate=pl.CostEstimate(
                flops=int(matmul_flops + 2 * M_pad * Fp), transcendentals=0,
                bytes_accessed=int(M_pad * Kp * in_it + Kp * Fp * in_it
                                   + M_pad * Fp * out_it)),
        )(cols_p, wf_p, scale, shift)
    else:
        out_flat = pl.pallas_call(
            bn_apply_kernel,
            out_shape=jax.ShapeDtypeStruct((M_pad, Fp), out_dtype),
            grid=(grid_m,),
            in_specs=[
                pl.BlockSpec((TM, Fp), lambda i: (i, 0)),
                pl.BlockSpec((1, Fp), lambda i: (0, 0)),
                pl.BlockSpec((1, Fp), lambda i: (0, 0)),
            ],
            out_specs=pl.BlockSpec((TM, Fp), lambda i: (i, 0)),
            compiler_params=pass2_params,
            cost_estimate=pl.CostEstimate(
                flops=int(2 * M_pad * Fp), transcendentals=0,
                bytes_accessed=int(M_pad * Fp * (y_it + out_it))),
        )(y_relu, scale, shift)

    out = out_flat[:M, :fo].reshape(N, Ho, Wo, fo)      # NHWC
    if out_layout == "NHWC":
        return out                                       # chain blocks in NHWC
    return out.transpose(0, 3, 1, 2)                     # NCHW (module semantics)


# ---------------------------------------------------------------------------
# Pure-JAX reference for correctness checking
# ---------------------------------------------------------------------------
def reference_encode_block(x, weight, gamma, beta, k=4, s=2, p=1):
    y = jax.lax.conv_general_dilated(
        x, weight, window_strides=(s, s), padding=((p, p), (p, p)),
        dimension_numbers=("NCHW", "OIHW", "NCHW"))
    y = jnp.maximum(y, 0.0)
    mean = jnp.mean(y, axis=(0, 2, 3), keepdims=True)
    var = jnp.mean((y - mean) ** 2, axis=(0, 2, 3), keepdims=True)
    yhat = (y - mean) * jax.lax.rsqrt(var + BN_EPS)
    return yhat * gamma.reshape(1, -1, 1, 1) + beta.reshape(1, -1, 1, 1)


if __name__ == "__main__":
    fi, fo, k, s, p = 4, 8, 4, 2, 1
    N, H, W = 2, 16, 16

    key = jax.random.PRNGKey(0)
    kx, kw = jax.random.split(key)
    x = jax.random.normal(kx, (N, fi, H, W), dtype=jnp.float32)
    weight = 0.1 * jax.random.normal(kw, (fo, fi, k, k), dtype=jnp.float32)
    gamma = jnp.ones((fo,), dtype=jnp.float32)
    beta = jnp.zeros((fo,), dtype=jnp.float32)

    ref = reference_encode_block(x, weight, gamma, beta, k=k, s=s, p=p)

    def check(out, atol, rtol, tag):
        out = jax.block_until_ready(out)
        assert out.shape == (N, fo, H // 2, W // 2), (tag, out.shape)
        assert jnp.allclose(out, ref, atol=atol, rtol=rtol), f"mismatch: {tag}"

    # f32 MXU inputs: exact structural check of both pass variants.
    check(encode_block(x, weight, gamma, beta, k=k, s=s, p=p,
                       matmul_dtype=None, fuse_recompute=True),
          1e-4, 1e-4, "f32 fused")
    check(encode_block(x, weight, gamma, beta, k=k, s=s, p=p,
                       matmul_dtype=None, fuse_recompute=False),
          1e-4, 1e-4, "f32 stored")

    # Default fast path: bf16 MXU inputs, fused BN-recompute pass 2.
    check(encode_block(x, weight, gamma, beta, k=k, s=s, p=p),
          3e-2, 3e-2, "bf16 fused")

    # Small TM exercises the (2, inner) parallel grid split and multi-step
    # stats accumulation in both pass-1 variants (incl. bf16 intermediate).
    check(encode_block(x, weight, gamma, beta, k=k, s=s, p=p,
                       fuse_recompute=True, max_tm=32),
          3e-2, 3e-2, "bf16 fused tiled")
    check(encode_block(x, weight, gamma, beta, k=k, s=s, p=p,
                       fuse_recompute=False, max_tm=32),
          3e-2, 3e-2, "bf16 stored tiled")

    print("KERNEL_OK")
</pallas_src>

<mosaic_0001>
module attributes {stable_mosaic.version = 11 : i64} {
  func.func @conv_relu_stats_kernel(%arg0: i32, %arg1: i32, %arg2: memref<128x128xf32, #tpu.memory_space<vmem>>, %arg3: memref<128x128xf32, #tpu.memory_space<vmem>>, %arg4: memref<1x8x128xf32, #tpu.memory_space<vmem>>, %arg5: memref<1x8x128xf32, #tpu.memory_space<vmem>>) attributes {dimension_semantics = [#tpu.dimension_semantics<parallel>, #tpu.dimension_semantics<arbitrary>], iteration_bounds = array<i64: 1, 1>, scalar_prefetch = 0 : i64, scratch_operands = 0 : i64, tpu.core_type = #tpu.core_type<tc>, window_params = [{transform_indices = @transform_0, window_bounds = array<i64: 128, 128>}, {pipeline_mode = #tpu.pipeline_mode<synchronous>, transform_indices = @transform_1, window_bounds = array<i64: 128, 128>}, {transform_indices = @transform_2, window_bounds = array<i64: 1, 8, 128>}, {transform_indices = @transform_3, window_bounds = array<i64: 1, 8, 128>}]} {
    %c0 = arith.constant 0 : index
    %c0_0 = arith.constant 0 : index
    %0 = vector.load %arg2[%c0, %c0_0] : memref<128x128xf32, #tpu.memory_space<vmem>>, vector<128x128xf32>
    %c0_1 = arith.constant 0 : index
    %c0_2 = arith.constant 0 : index
    %1 = vector.load %arg3[%c0_1, %c0_2] : memref<128x128xf32, #tpu.memory_space<vmem>>, vector<128x128xf32>
    %cst = arith.constant dense<0.000000e+00> : vector<128x128xf32>
    %2 = tpu.matmul %0, %1, %cst {dimension_numbers = #tpu.dot_dimension_numbers<[1], [0], [0], [1], [0, 0, 1, 1], [], []>} : vector<128x128xf32>, vector<128x128xf32>, vector<128x128xf32> -> vector<128x128xf32>
    %cst_3 = arith.constant 0.000000e+00 : f32
    %3 = vector.broadcast %cst_3 : f32 to vector<128x128xf32>
    %4 = arith.maximumf %2, %3 : vector<128x128xf32>
    %c0_i32 = arith.constant 0 : i32
    %5 = arith.cmpi eq, %arg1, %c0_i32 : i32
    %6 = arith.extui %5 : i1 to i32
    %c0_i32_4 = arith.constant 0 : i32
    %7 = arith.cmpi ne, %6, %c0_i32_4 : i32
    scf.if %7 {
      %cst_19 = arith.constant 0.000000e+00 : f32
      %20 = vector.broadcast %cst_19 : f32 to vector<1x8x128xf32>
      %c0_20 = arith.constant 0 : index
      %c0_21 = arith.constant 0 : index
      %c0_22 = arith.constant 0 : index
      %21 = vector.load %arg4[%c0_20, %c0_21, %c0_22] : memref<1x8x128xf32, #tpu.memory_space<vmem>>, vector<1x8x128xf32>
      tpu.vector_store %arg4[%c0_20, %c0_21, %c0_22], %20 {strides = array<i32>} : memref<1x8x128xf32, #tpu.memory_space<vmem>>, vector<1x8x128xf32>,
      %cst_23 = arith.constant 0.000000e+00 : f32
      %22 = vector.broadcast %cst_23 : f32 to vector<1x8x128xf32>
      %c0_24 = arith.constant 0 : index
      %c0_25 = arith.constant 0 : index
      %c0_26 = arith.constant 0 : index
      %23 = vector.load %arg5[%c0_24, %c0_25, %c0_26] : memref<1x8x128xf32, #tpu.memory_space<vmem>>, vector<1x8x128xf32>
      tpu.vector_store %arg5[%c0_24, %c0_25, %c0_26], %22 {strides = array<i32>} : memref<1x8x128xf32, #tpu.memory_space<vmem>>, vector<1x8x128xf32>,
    } else {
    }
    %8 = vector.shape_cast %4 : vector<128x128xf32> to vector<16x8x128xf32>
    %c0_5 = arith.constant 0 : index
    %c0_6 = arith.constant 0 : index
    %c0_7 = arith.constant 0 : index
    %9 = vector.load %arg4[%c0_5, %c0_6, %c0_7] : memref<1x8x128xf32, #tpu.memory_space<vmem>>, vector<1x8x128xf32>
    %cst_8 = arith.constant dense<0.000000e+00> : vector<8x128xf32>
    %10 = vector.multi_reduction <add>, %8, %cst_8 [0] : vector<16x8x128xf32> to vector<8x128xf32>
    %11 = vector.shape_cast %10 : vector<8x128xf32> to vector<1x8x128xf32>
    %12 = arith.addf %9, %11 : vector<1x8x128xf32>
    %c0_9 = arith.constant 0 : index
    %c0_10 = arith.constant 0 : index
    %c0_11 = arith.constant 0 : index
    %13 = vector.load %arg4[%c0_9, %c0_10, %c0_11] : memref<1x8x128xf32, #tpu.memory_space<vmem>>, vector<1x8x128xf32>
    tpu.vector_store %arg4[%c0_9, %c0_10, %c0_11], %12 {strides = array<i32>} : memref<1x8x128xf32, #tpu.memory_space<vmem>>, vector<1x8x128xf32>,
    %c0_12 = arith.constant 0 : index
    %c0_13 = arith.constant 0 : index
    %c0_14 = arith.constant 0 : index
    %14 = vector.load %arg5[%c0_12, %c0_13, %c0_14] : memref<1x8x128xf32, #tpu.memory_space<vmem>>, vector<1x8x128xf32>
    %15 = arith.mulf %8, %8 : vector<16x8x128xf32>
    %cst_15 = arith.constant dense<0.000000e+00> : vector<8x128xf32>
    %16 = vector.multi_reduction <add>, %15, %cst_15 [0] : vector<16x8x128xf32> to vector<8x128xf32>
    %17 = vector.shape_cast %16 : vector<8x128xf32> to vector<1x8x128xf32>
    %18 = arith.addf %14, %17 : vector<1x8x128xf32>
    %c0_16 = arith.constant 0 : index
    %c0_17 = arith.constant 0 : index
    %c0_18 = arith.constant 0 : index
    %19 = vector.load %arg5[%c0_16, %c0_17, %c0_18] : memref<1x8x128xf32, #tpu.memory_space<vmem>>, vector<1x8x128xf32>
    tpu.vector_store %arg5[%c0_16, %c0_17, %c0_18], %18 {strides = array<i32>} : memref<1x8x128xf32, #tpu.memory_space<vmem>>, vector<1x8x128xf32>,
    return
  }
  func.func @transform_0(%arg0: i32, %arg1: i32) -> (i32, i32) {
    %c1_i32 = arith.constant 1 : i32
    %0 = arith.muli %arg0, %c1_i32 : i32
    %1 = arith.addi %0, %arg1 : i32
    %c0_i32 = arith.constant 0 : i32
    %c0_i32_0 = arith.constant 0 : i32
    return %1, %c0_i32 : i32, i32
  }
  func.func @transform_1(%arg0: i32, %arg1: i32) -> (i32, i32) {
    %c0_i32 = arith.constant 0 : i32
    %c0_i32_0 = arith.constant 0 : i32
    %c0_i32_1 = arith.constant 0 : i32
    return %c0_i32, %c0_i32_0 : i32, i32
  }
  func.func @transform_2(%arg0: i32, %arg1: i32) -> (i32, i32, i32) {
    %c0_i32 = arith.constant 0 : i32
    %c0_i32_0 = arith.constant 0 : i32
    %c0_i32_1 = arith.constant 0 : i32
    return %arg0, %c0_i32, %c0_i32_0 : i32, i32, i32
  }
  func.func @transform_3(%arg0: i32, %arg1: i32) -> (i32, i32, i32) {
    %c0_i32 = arith.constant 0 : i32
    %c0_i32_0 = arith.constant 0 : i32
    %c0_i32_1 = arith.constant 0 : i32
    return %arg0, %c0_i32, %c0_i32_0 : i32, i32, i32
  }
}

</mosaic_0001>

<llo_original>
// kernel: tpu_custom_call.1
$region0: #{tpu_custom_call.1}
  #allocation0 [shape = 'u32[]', space=smem, size = 0x4, offset = 0x4, fixed_abs, tag = 'smem constant byte address 0x4 - core index']
  #allocation1 [shape = 'u32[144,128]{1,0:T(1,128)}', space=vmem, size = 0x12000, scoped, tag = 'internal scratch']
  %s0 = inlined_call_operand.hbm [shape: f32[128,128], index: 0, kind: input, shape index: {}]
  %s1 = inlined_call_operand.hbm [shape: f32[128,128], index: 1, kind: input, shape index: {}]
  %s2 = inlined_call_operand.hbm [shape: f32[1,8,128], index: 2, kind: output, shape index: {0}]
  %s3 = inlined_call_operand.hbm [shape: f32[1,8,128], index: 3, kind: output, shape index: {1}]
  %4 = xla_tuple %s2, %s3
  %s5 = sld [smem:[#allocation0]]
  $region38: #{tpu_custom_call.1} parent=0
    _
  %s7 = ssub.s32 1, %s5
  %s8 = scalar_select 0, %s7, %s5
  $region1: #{tpu_custom_call.1} parent=0
    #allocation2 [shape = 'u8[65536]{0}', space=vmem, size = 0x10000, scoped, tag = 'input window, operand 0, single buffered']
    #allocation3 [shape = 's32[1]{0}', space=sflag, size = 0x4, scoped, tag = 'scoped memory for tpu_custom_call.1']
    #allocation4 [shape = 's32[1]{0}', space=sflag, size = 0x4, scoped, tag = 'scoped memory for tpu_custom_call.1']
    #allocation5 [shape = 'u8[65536]{0}', space=vmem, size = 0x10000, scoped, tag = 'input window, operand 1, single buffered']
    #allocation6 [shape = 's32[1]{0}', space=sflag, size = 0x4, scoped, tag = 'scoped memory for tpu_custom_call.1']
    #allocation7 [shape = 'u8[4096]{0}', space=vmem, size = 0x1000, scoped, tag = 'output window, operand 0, single buffered']
    #allocation8 [shape = 'u8[4096]{0}', space=vmem, size = 0x1000, scoped, tag = 'output window, operand 1, single buffered']
    #allocation9 [shape = 's32[1]{0}', space=sflag, size = 0x4, scoped, tag = 'scoped memory for tpu_custom_call.1']
    %9 = vsyncpa [#allocation3], 0
    %10 = vsyncpa [#allocation6], 0
    %11 = vsyncpa [#allocation4], 0
    %12 = vsyncpa [#allocation9], 0
    // Predicated region
    $region2: #{tpu_custom_call.1} parent=1 // pred_check
      _
    $region3: #{tpu_custom_call.1} parent=1 // pred_check_branch
      %14 = sbr.rel (0) target = $region5
    $region4: #{tpu_custom_call.1} parent=1 // pred_region
      %s15 = sadd.s32 0, 0
      %s16 = smul.u32 16, %s15
      %s18 = ssub.s32 2048, 2048
      %19 = vsyncadd [#allocation3], %s18
      %s20 = smul.addr %s16, 128
      %s21 = scalar_lea.hbm %s0, %s20
      %s22 = sshll.u32 [#allocation2], 4
      %s23 = int_to_ptr.vmem [resolvable:$true] %s22
      %28 = dma.hbm_to_vmem [thread:$0]  %s21, 2048, %s23, [#allocation3], 128, 128, 8
    $region5: #{tpu_custom_call.1} parent=1 // pred_fallthru
      _
    // Predicated region
    $region6: #{tpu_custom_call.1} parent=1 // pred_check
      _
    $region7: #{tpu_custom_call.1} parent=1 // pred_check_branch
      %30 = sbr.rel (0) target = $region9
    $region8: #{tpu_custom_call.1} parent=1 // pred_region
      %s32 = ssub.s32 2048, 2048
      %33 = vsyncadd [#allocation6], %s32
      %s34 = sshll.u32 [#allocation5], 4
      %s35 = int_to_ptr.vmem [resolvable:$true] %s34
      %40 = dma.hbm_to_vmem [thread:$0]  %s1, 2048, %s35, [#allocation6], 128, 128, 8
    $region9: #{tpu_custom_call.1} parent=1 // pred_fallthru
      _
    // Predicated region
    $region10: #{tpu_custom_call.1} parent=1 // pred_check
      _
    $region11: #{tpu_custom_call.1} parent=1 // pred_check_branch
      %42 = sbr.rel (0) target = $region13
    $region12: #{tpu_custom_call.1} parent=1 // pred_region
      %43 = dma.done [#allocation3], 2048
    $region13: #{tpu_custom_call.1} parent=1 // pred_fallthru
      _
    // Predicated region
    $region14: #{tpu_custom_call.1} parent=1 // pred_check
      _
    $region15: #{tpu_custom_call.1} parent=1 // pred_check_branch
      %45 = sbr.rel (0) target = $region17
    $region16: #{tpu_custom_call.1} parent=1 // pred_region
      %46 = dma.done [#allocation6], 2048
    $region17: #{tpu_custom_call.1} parent=1 // pred_fallthru
      _
    %s47 = sadd.s32 0, 0
    %s48 = smul.u32 16, %s47
    %v49 = vld [vmem:[#allocation2] sm:$0xff]
    %v50 = vld [vmem:[#allocation2 + $0x8] sm:$0xff]
    %v51 = vld [vmem:[#allocation2 + $0x10] sm:$0xff]
    %v52 = vld [vmem:[#allocation2 + $0x18] sm:$0xff]
    %v53 = vld [vmem:[#allocation2 + $0x20] sm:$0xff]
    %v54 = vld [vmem:[#allocation2 + $0x28] sm:$0xff]
    %v55 = vld [vmem:[#allocation2 + $0x30] sm:$0xff]
    %v56 = vld [vmem:[#allocation2 + $0x38] sm:$0xff]
    %v57 = vld [vmem:[#allocation2 + $0x40] sm:$0xff]
    %v58 = vld [vmem:[#allocation2 + $0x48] sm:$0xff]
    %v59 = vld [vmem:[#allocation2 + $0x50] sm:$0xff]
    %v60 = vld [vmem:[#allocation2 + $0x58] sm:$0xff]
    %v61 = vld [vmem:[#allocation2 + $0x60] sm:$0xff]
    %v62 = vld [vmem:[#allocation2 + $0x68] sm:$0xff]
    %v63 = vld [vmem:[#allocation2 + $0x70] sm:$0xff]
    %v64 = vld [vmem:[#allocation2 + $0x78] sm:$0xff]
    %v65 = vld [vmem:[#allocation5] sm:$0xff]
    %v66 = vld [vmem:[#allocation5 + $0x8] sm:$0xff]
    %v67 = vld [vmem:[#allocation5 + $0x10] sm:$0xff]
    %v68 = vld [vmem:[#allocation5 + $0x18] sm:$0xff]
    %v69 = vld [vmem:[#allocation5 + $0x20] sm:$0xff]
    %v70 = vld [vmem:[#allocation5 + $0x28] sm:$0xff]
    %v71 = vld [vmem:[#allocation5 + $0x30] sm:$0xff]
    %v72 = vld [vmem:[#allocation5 + $0x38] sm:$0xff]
    %v73 = vld [vmem:[#allocation5 + $0x40] sm:$0xff]
    %v74 = vld [vmem:[#allocation5 + $0x48] sm:$0xff]
    %v75 = vld [vmem:[#allocation5 + $0x50] sm:$0xff]
    %v76 = vld [vmem:[#allocation5 + $0x58] sm:$0xff]
    %v77 = vld [vmem:[#allocation5 + $0x60] sm:$0xff]
    %v78 = vld [vmem:[#allocation5 + $0x68] sm:$0xff]
    %v79 = vld [vmem:[#allocation5 + $0x70] sm:$0xff]
    %v80 = vld [vmem:[#allocation5 + $0x78] sm:$0xff]
    %81 = vmatprep.subr.mxu0 0.0
    %82 = vmatpush1.msra.mxu0 %v65
    %83 = vmatprep.subr.mxu0 0.0
    %84 = vmatpush1.msra.mxu0 %v66
    %85 = vmatprep.subr.mxu0 0.0
    %86 = vmatpush1.msra.mxu0 %v67
    %87 = vmatprep.subr.mxu0 0.0
    %88 = vmatpush1.msra.mxu0 %v68
    %89 = vmatprep.subr.mxu0 0.0
    %90 = vmatpush1.msra.mxu0 %v69
    %91 = vmatprep.subr.mxu0 0.0
    %92 = vmatpush1.msra.mxu0 %v70
    %93 = vmatprep.subr.mxu0 0.0
    %94 = vmatpush1.msra.mxu0 %v71
    %95 = vmatprep.subr.mxu0 0.0
    %96 = vmatpush1.msra.mxu0 %v72
    %97 = vmatprep.subr.mxu0 0.0
    %98 = vmatpush1.msra.mxu0 %v73
    %99 = vmatprep.subr.mxu0 0.0
    %100 = vmatpush1.msra.mxu0 %v74
    %101 = vmatprep.subr.mxu0 0.0
    %102 = vmatpush1.msra.mxu0 %v75
    %103 = vmatprep.subr.mxu0 0.0
    %104 = vmatpush1.msra.mxu0 %v76
    %105 = vmatprep.subr.mxu0 0.0
    %106 = vmatpush1.msra.mxu0 %v77
    %107 = vmatprep.subr.mxu0 0.0
    %108 = vmatpush1.msra.mxu0 %v78
    %109 = vmatprep.subr.mxu0 0.0
    %110 = vmatpush1.msra.mxu0 %v79
    %111 = vmatprep.subr.mxu0 0.0
    %112 = vmatpush1.msra.mxu0 %v80
    %113 = vmatprep.subr.mxu0 0.0
    %114 = vmatpush1.msra.mxu0 0.0
    %115 = vmatprep.subr.mxu0 0.0
    %116 = vmatpush1.msra.mxu0 0.0
    %117 = vmatprep.subr.mxu0 0.0
    %118 = vmatpush1.msra.mxu0 0.0
    %119 = vmatprep.subr.mxu0 0.0
    %120 = vmatpush1.msra.mxu0 0.0
    %121 = vmatprep.subr.mxu0 0.0
    %122 = vmatpush1.msra.mxu0 0.0
    %123 = vmatprep.subr.mxu0 0.0
    %124 = vmatpush1.msra.mxu0 0.0
    %125 = vmatprep.subr.mxu0 0.0
    %126 = vmatpush1.msra.mxu0 0.0
    %127 = vmatprep.subr.mxu0 0.0
    %128 = vmatpush1.msra.mxu0 0.0
    %129 = vmatprep.subr.mxu0 0.0
    %130 = vmatpush1.msra.mxu0 0.0
    %131 = vmatprep.subr.mxu0 0.0
    %132 = vmatpush1.msra.mxu0 0.0
    %133 = vmatprep.subr.mxu0 0.0
    %134 = vmatpush1.msra.mxu0 0.0
    %135 = vmatprep.subr.mxu0 0.0
    %136 = vmatpush1.msra.mxu0 0.0
    %137 = vmatprep.subr.mxu0 0.0
    %138 = vmatpush1.msra.mxu0 0.0
    %139 = vmatprep.subr.mxu0 0.0
    %140 = vmatpush1.msra.mxu0 0.0
    %141 = vmatprep.subr.mxu0 0.0
    %142 = vmatpush1.msra.mxu0 0.0
    %143 = vmatprep.subr.mxu0 0.0
    %144 = vmatpush1.msra.mxu0 0.0
    %145 = vmatprep.mubr.f32.mxu0 0.0
    %146 = vmatmul.mubr.f32.gmra.mrb[0].mxu0 %v49
    %v147 = vpop.f32.mrb[0].mxu0
    %v148 = vadd.f32 0.0, %v147
    %v149 = vpop.f32.mrb[0].mxu0
    %150 = vmatprep.mubr.f32.mxu0 0.0
    %151 = vmatmul.mubr.f32.gmra.mrb[0].mxu0 %v50
    %v152 = vpop.f32.mrb[0].mxu0
    %v153 = vadd.f32 0.0, %v152
    %v154 = vpop.f32.mrb[0].mxu0
    %155 = vmatprep.mubr.f32.mxu0 0.0
    %156 = vmatmul.mubr.f32.gmra.mrb[0].mxu0 %v51
    %v157 = vpop.f32.mrb[0].mxu0
    %v158 = vadd.f32 0.0, %v157
    %v159 = vpop.f32.mrb[0].mxu0
    %160 = vmatprep.mubr.f32.mxu0 0.0
    %161 = vmatmul.mubr.f32.gmra.mrb[0].mxu0 %v52
    %v162 = vpop.f32.mrb[0].mxu0
    %v163 = vadd.f32 0.0, %v162
    %v164 = vpop.f32.mrb[0].mxu0
    %165 = vmatprep.mubr.f32.mxu0 0.0
    %166 = vmatmul.mubr.f32.gmra.mrb[0].mxu0 %v53
    %v167 = vpop.f32.mrb[0].mxu0
    %v168 = vadd.f32 0.0, %v167
    %v169 = vpop.f32.mrb[0].mxu0
    %170 = vmatprep.mubr.f32.mxu0 0.0
    %171 = vmatmul.mubr.f32.gmra.mrb[0].mxu0 %v54
    %v172 = vpop.f32.mrb[0].mxu0
    %v173 = vadd.f32 0.0, %v172
    %v174 = vpop.f32.mrb[0].mxu0
    %175 = vmatprep.mubr.f32.mxu0 0.0
    %176 = vmatmul.mubr.f32.gmra.mrb[0].mxu0 %v55
    %v177 = vpop.f32.mrb[0].mxu0
    %v178 = vadd.f32 0.0, %v177
    %v179 = vpop.f32.mrb[0].mxu0
    %180 = vmatprep.mubr.f32.mxu0 0.0
    %181 = vmatmul.mubr.f32.gmra.mrb[0].mxu0 %v56
    %v182 = vpop.f32.mrb[0].mxu0
    %v183 = vadd.f32 0.0, %v182
    %v184 = vpop.f32.mrb[0].mxu0
    %185 = vmatprep.mubr.f32.mxu0 0.0
    %186 = vmatmul.mubr.f32.gmra.mrb[0].mxu0 %v57
    %v187 = vpop.f32.mrb[0].mxu0
    %v188 = vadd.f32 0.0, %v187
    %v189 = vpop.f32.mrb[0].mxu0
    %190 = vmatprep.mubr.f32.mxu0 0.0
    %191 = vmatmul.mubr.f32.gmra.mrb[0].mxu0 %v58
    %v192 = vpop.f32.mrb[0].mxu0
    %v193 = vadd.f32 0.0, %v192
    %v194 = vpop.f32.mrb[0].mxu0
    %195 = vmatprep.mubr.f32.mxu0 0.0
    %196 = vmatmul.mubr.f32.gmra.mrb[0].mxu0 %v59
    %v197 = vpop.f32.mrb[0].mxu0
    %v198 = vadd.f32 0.0, %v197
    %v199 = vpop.f32.mrb[0].mxu0
    %200 = vmatprep.mubr.f32.mxu0 0.0
    %201 = vmatmul.mubr.f32.gmra.mrb[0].mxu0 %v60
    %v202 = vpop.f32.mrb[0].mxu0
    %v203 = vadd.f32 0.0, %v202
    %v204 = vpop.f32.mrb[0].mxu0
    %205 = vmatprep.mubr.f32.mxu0 0.0
    %206 = vmatmul.mubr.f32.gmra.mrb[0].mxu0 %v61
    %v207 = vpop.f32.mrb[0].mxu0
    %v208 = vadd.f32 0.0, %v207
    %v209 = vpop.f32.mrb[0].mxu0
    %210 = vmatprep.mubr.f32.mxu0 0.0
    %211 = vmatmul.mubr.f32.gmra.mrb[0].mxu0 %v62
    %v212 = vpop.f32.mrb[0].mxu0
    %v213 = vadd.f32 0.0, %v212
    %v214 = vpop.f32.mrb[0].mxu0
    %215 = vmatprep.mubr.f32.mxu0 0.0
    %216 = vmatmul.mubr.f32.gmra.mrb[0].mxu0 %v63
    %v217 = vpop.f32.mrb[0].mxu0
    %v218 = vadd.f32 0.0, %v217
    %v219 = vpop.f32.mrb[0].mxu0
    %220 = vmatprep.mubr.f32.mxu0 0.0
    %221 = vmatmul.mubr.f32.gmra.mrb[0].mxu0 %v64
    %v222 = vpop.f32.mrb[0].mxu0
    %v223 = vadd.f32 0.0, %v222
    %v224 = vpop.f32.mrb[0].mxu0
    %225 = vdwg.mxu0
    %v226 = vmax.f32 %v148, 0.0
    %v227 = vmax.f32 %v153, 0.0
    %v228 = vmax.f32 %v158, 0.0
    %v229 = vmax.f32 %v163, 0.0
    %v230 = vmax.f32 %v168, 0.0
    %v231 = vmax.f32 %v173, 0.0
    %v232 = vmax.f32 %v178, 0.0
    %v233 = vmax.f32 %v183, 0.0
    %v234 = vmax.f32 %v188, 0.0
    %v235 = vmax.f32 %v193, 0.0
    %v236 = vmax.f32 %v198, 0.0
    %v237 = vmax.f32 %v203, 0.0
    %v238 = vmax.f32 %v208, 0.0
    %v239 = vmax.f32 %v213, 0.0
    %v240 = vmax.f32 %v218, 0.0
    %v241 = vmax.f32 %v223, 0.0
    %p242 = scmp.eq.s32.totalorder 0, 0
    // Predicated region
    $region18: #{tpu_custom_call.1} parent=1 // pred_check
      %p243 = pneg %p242
    $region19: #{tpu_custom_call.1} parent=1 // pred_check_branch
      %245 = sbr.rel (%p243) target = $region21
    $region20: #{tpu_custom_call.1} parent=1 // pred_region
      %246 = vst [vmem:[#allocation7] sm:$0xff] 0.0
      %247 = vst [vmem:[#allocation8] sm:$0xff] 0.0
    $region21: #{tpu_custom_call.1} parent=1 // pred_fallthru
      _
    %v248 = vld [vmem:[#allocation7] sm:$0xff]
    %v249 = vadd.f32 %v226, %v227
    %v250 = vadd.f32 %v249, %v228
    %v251 = vadd.f32 %v250, %v229
    %v252 = vadd.f32 %v251, %v230
    %v253 = vadd.f32 %v252, %v231
    %v254 = vadd.f32 %v253, %v232
    %v255 = vadd.f32 %v254, %v233
    %v256 = vadd.f32 %v255, %v234
    %v257 = vadd.f32 %v256, %v235
    %v258 = vadd.f32 %v257, %v236
    %v259 = vadd.f32 %v258, %v237
    %v260 = vadd.f32 %v259, %v238
    %v261 = vadd.f32 %v260, %v239
    %v262 = vadd.f32 %v261, %v240
    %v263 = vadd.f32 %v262, %v241
    %v264 = vadd.f32 %v248, %v263
    %265 = vst [vmem:[#allocation7] sm:$0xff] %v264
    %v266 = vld [vmem:[#allocation8] sm:$0xff]
    %v267 = vmul.f32 %v226, %v226
    %v268 = vmul.f32 %v227, %v227
    %v269 = vmul.f32 %v228, %v228
    %v270 = vmul.f32 %v229, %v229
    %v271 = vmul.f32 %v230, %v230
    %v272 = vmul.f32 %v231, %v231
    %v273 = vmul.f32 %v232, %v232
    %v274 = vmul.f32 %v233, %v233
    %v275 = vmul.f32 %v234, %v234
    %v276 = vmul.f32 %v235, %v235
    %v277 = vmul.f32 %v236, %v236
    %v278 = vmul.f32 %v237, %v237
    %v279 = vmul.f32 %v238, %v238
    %v280 = vmul.f32 %v239, %v239
    %v281 = vmul.f32 %v240, %v240
    %v282 = vmul.f32 %v241, %v241
    %v283 = vadd.f32 %v267, %v268
    %v284 = vadd.f32 %v283, %v269
    %v285 = vadd.f32 %v284, %v270
    %v286 = vadd.f32 %v285, %v271
    %v287 = vadd.f32 %v286, %v272
    %v288 = vadd.f32 %v287, %v273
    %v289 = vadd.f32 %v288, %v274
    %v290 = vadd.f32 %v289, %v275
    %v291 = vadd.f32 %v290, %v276
    %v292 = vadd.f32 %v291, %v277
    %v293 = vadd.f32 %v292, %v278
    %v294 = vadd.f32 %v293, %v279
    %v295 = vadd.f32 %v294, %v280
    %v296 = vadd.f32 %v295, %v281
    %v297 = vadd.f32 %v296, %v282
    %v298 = vadd.f32 %v266, %v297
    %299 = vst [vmem:[#allocation8] sm:$0xff] %v298
    // Predicated region
    $region22: #{tpu_custom_call.1} parent=1 // pred_check
      _
    $region23: #{tpu_custom_call.1} parent=1 // pred_check_branch
      %301 = sbr.rel (0) target = $region25
    $region24: #{tpu_custom_call.1} parent=1 // pred_region
      %s303 = ssub.s32 128, 128
      %304 = vsyncadd [#allocation4], %s303
      %s306 = sshll.u32 [#allocation7], 4
      %s307 = int_to_ptr.vmem [resolvable:$true] %s306
      %309 = dma.vmem_to_hbm [thread:$0]  %s307, 128, %s2, [#allocation4]
    $region25: #{tpu_custom_call.1} parent=1 // pred_fallthru
      _
    // Predicated region
    $region26: #{tpu_custom_call.1} parent=1 // pred_check
      _
    $region27: #{tpu_custom_call.1} parent=1 // pred_check_branch
      %311 = sbr.rel (0) target = $region29
    $region28: #{tpu_custom_call.1} parent=1 // pred_region
      %s313 = ssub.s32 128, 128
      %314 = vsyncadd [#allocation9], %s313
      %s316 = sshll.u32 [#allocation8], 4
      %s317 = int_to_ptr.vmem [resolvable:$true] %s316
      %319 = dma.vmem_to_hbm [thread:$0]  %s317, 128, %s3, [#allocation9]
    $region29: #{tpu_custom_call.1} parent=1 // pred_fallthru
      _
    // Predicated region
    $region30: #{tpu_custom_call.1} parent=1 // pred_check
      _
    $region31: #{tpu_custom_call.1} parent=1 // pred_check_branch
      %321 = sbr.rel (0) target = $region33
    $region32: #{tpu_custom_call.1} parent=1 // pred_region
      %322 = dma.done [#allocation4], 128
    $region33: #{tpu_custom_call.1} parent=1 // pred_fallthru
      _
    // Predicated region
    $region34: #{tpu_custom_call.1} parent=1 // pred_check
      _
    $region35: #{tpu_custom_call.1} parent=1 // pred_check_branch
      %324 = sbr.rel (0) target = $region37
    $region36: #{tpu_custom_call.1} parent=1 // pred_region
      %325 = dma.done [#allocation9], 128
    $region37: #{tpu_custom_call.1} parent=1 // pred_fallthru
      _
    %326 = vsyncpa [#allocation3], 1
    %327 = vsyncpa [#allocation6], 1
    %328 = vsyncpa [#allocation4], 1
    %329 = vsyncpa [#allocation9], 1

</llo_original>
